<compile_context>
chip_gen: v7x
topology: tpu7x:2x2x1
jax: 0.10.0
libtpu: 0.0.40
codegen_flags: <defaults>
</compile_context>

<pallas_src>
import jax
import jax.numpy as jnp
from jax import lax
from jax.experimental import pallas as pl
from jax.experimental.pallas import tpu as pltpu

LANE = 128
SUBLANE = 8
MIB = 1 << 20


def _round_up(x, m):
    return ((x + m - 1) // m) * m


def _linear_kernel(x_ref, w_ref, b_ref, o_ref):
    # x_ref: (TB, H)      streamed activation tile (cast to bf16 for the MXU)
    # w_ref: (C_pad, H)   bf16 weight in PyTorch [C, H] layout, VMEM-resident
    # b_ref: (1, C_pad)   f32 bias, VMEM-resident
    # o_ref: (TB, C_pad)  lane-dense output tile
    x = x_ref[...].astype(jnp.bfloat16)
    acc = lax.dot_general(                       # logits = x @ w.T, f32 MXU accumulation
        x, w_ref[...],
        dimension_numbers=(((1,), (1,)), ((), ())),
        preferred_element_type=jnp.float32,
    )
    o_ref[...] = (acc + b_ref[...]).astype(o_ref.dtype)


def prepare_params(weight, bias):
    """One-time init: pad class dim to 128 lanes, cast weight to bf16, keep bias f32."""
    C, H = weight.shape
    c_pad = _round_up(max(C, LANE), LANE)
    w_p = jnp.zeros((c_pad, H), jnp.bfloat16).at[:C, :].set(weight.astype(jnp.bfloat16))
    b_p = jnp.zeros((1, c_pad), jnp.float32).at[0, :C].set(bias.astype(jnp.float32))
    return w_p, b_p


def _vmem_capacity_bytes():
    try:
        info = pltpu.get_tpu_info()
        cap = int(getattr(info, "vmem_capacity_bytes", 0))
        if cap > 0:
            return cap
    except Exception:
        pass
    return 64 * MIB  # conservative default (v7x per-TensorCore)


def _choose_tiling(B, H, c_pad, x_bytes, out_bytes, w_bytes):
    """Pick batch tile TB and a footprint-derived vmem limit."""
    capacity = _vmem_capacity_bytes()
    # ~56 MiB usable of v7x's 64 MiB; ~100 MiB of v5e/v6e's 128 MiB.
    usable_cap = min(capacity - 8 * MIB, 100 * MIB)

    # Target ~6 MiB of streamed activation bytes per grid step.
    tb = _round_up(max(1, (6 * MIB) // max(1, H * x_bytes)), SUBLANE)

    # Keep double-buffered activation + output tiles within ~half the usable VMEM.
    per_row = 2 * (H * x_bytes + c_pad * out_bytes)
    tb_vmem_cap = max(SUBLANE, ((usable_cap // 2) // per_row) // SUBLANE * SUBLANE)
    tb = min(tb, tb_vmem_cap)

    # Keep >= 2 grid steps when the batch allows it (megacore sharding on v7x).
    if B > SUBLANE:
        tb = min(tb, _round_up(-(-B // 2), SUBLANE))
    tb = max(SUBLANE, min(tb, _round_up(B, SUBLANE)))

    footprint = (2 * tb * H * x_bytes            # streamed activations (double-buffered)
                 + 2 * tb * c_pad * out_bytes    # output tiles (double-buffered)
                 + c_pad * H * w_bytes           # resident bf16 weight (single buffer)
                 + 2 * c_pad * 4                 # bias
                 + 1 * MIB)                      # compiler scratch slack
    vmem_limit = int(min(usable_cap, max(2 * footprint, 16 * MIB)))
    return tb, vmem_limit


def _build_call(B, H, c_pad, tb, out_dtype, vmem_limit, single_buffer_invariants):
    if single_buffer_invariants:
        # Constant (0,0) index_map -> fetched once; a single buffer is sufficient.
        w_spec = pl.BlockSpec((c_pad, H), lambda i: (0, 0), pipeline_mode=pl.Buffered(1))
        b_spec = pl.BlockSpec((1, c_pad), lambda i: (0, 0), pipeline_mode=pl.Buffered(1))
    else:
        w_spec = pl.BlockSpec((c_pad, H), lambda i: (0, 0))
        b_spec = pl.BlockSpec((1, c_pad), lambda i: (0, 0))
    return pl.pallas_call(
        _linear_kernel,
        out_shape=jax.ShapeDtypeStruct((B, c_pad), out_dtype),
        grid=(pl.cdiv(B, tb),),                        # partial last block handled by Pallas
        in_specs=[
            pl.BlockSpec((tb, H), lambda i: (i, 0)),   # streamed activations
            w_spec,                                    # VMEM-resident bf16 weight
            b_spec,                                    # VMEM-resident f32 bias
        ],
        out_specs=pl.BlockSpec((tb, c_pad), lambda i: (i, 0)),
        compiler_params=pltpu.CompilerParams(
            dimension_semantics=("parallel",),         # megacore sharding on v7x
            vmem_limit_bytes=vmem_limit,
        ),
    )


def classifier_forward(features, weight_padded, bias_padded, *, num_classes,
                       slice_output=True):
    """features: [B, H] (f32 or bf16), weight_padded: [C_pad, H] bf16, bias_padded: [1, C_pad] f32."""
    B, H = features.shape
    c_pad, H2 = weight_padded.shape
    assert H == H2, "hidden_dim mismatch between features and padded weight"
    assert bias_padded.shape == (1, c_pad)

    x_bytes = features.dtype.itemsize
    out_dtype = jnp.bfloat16 if features.dtype == jnp.bfloat16 else jnp.float32
    out_bytes = jnp.dtype(out_dtype).itemsize
    w_bytes = weight_padded.dtype.itemsize

    tb, vmem_limit = _choose_tiling(B, H, c_pad, x_bytes, out_bytes, w_bytes)

    try:
        out = _build_call(B, H, c_pad, tb, out_dtype, vmem_limit, True)(
            features, weight_padded, bias_padded)
    except Exception:
        # Fallback without single-buffered invariant blocks (pure perf feature).
        out = _build_call(B, H, c_pad, tb, out_dtype, vmem_limit, False)(
            features, weight_padded, bias_padded)

    if not slice_output:
        return out  # lane-padded slab; let a fused/lazy consumer slice instead
    return out[:B, :num_classes]


if __name__ == "__main__":
    hidden_dim = 256
    num_classes = 5
    batch = 13  # deliberately not a multiple of 8: exercises the no-pad partial last block

    key = jax.random.PRNGKey(0)
    k_x, k_w, k_b = jax.random.split(key, 3)

    # Deterministic parameter init (mimics nn.Linear uniform(-1/sqrt(H), 1/sqrt(H))).
    bound = 1.0 / jnp.sqrt(jnp.float32(hidden_dim))
    weight = jax.random.uniform(k_w, (num_classes, hidden_dim),
                                minval=-bound, maxval=bound, dtype=jnp.float32)
    bias = jax.random.uniform(k_b, (num_classes,),
                              minval=-bound, maxval=bound, dtype=jnp.float32)
    features = jax.random.normal(k_x, (batch, hidden_dim), dtype=jnp.float32)

    # Pad/cast parameters once (init-time), then run the kernel.
    w_padded, b_padded = prepare_params(weight, bias)
    logits = classifier_forward(features, w_padded, b_padded, num_classes=num_classes)
    logits = jax.block_until_ready(logits)

    # Reference 1: same bf16-input / f32-accumulate math as the kernel (tight tolerance).
    ref_bf16 = lax.dot_general(
        features.astype(jnp.bfloat16), weight.astype(jnp.bfloat16),
        dimension_numbers=(((1,), (1,)), ((), ())),
        preferred_element_type=jnp.float32,
    ) + bias
    # Reference 2: full-precision F.linear (loose tolerance, sanity only).
    ref_f32 = features @ weight.T + bias

    assert logits.shape == (batch, num_classes)
    assert jnp.allclose(logits, ref_bf16, atol=2e-3, rtol=2e-3)
    assert jnp.allclose(logits, ref_f32, atol=5e-2, rtol=5e-2)

    print("KERNEL_OK")
</pallas_src>

<mosaic_0001>
module attributes {stable_mosaic.version = 11 : i64} {
  func.func @_linear_kernel(%arg0: i32, %arg1: memref<8x256xf32, #tpu.memory_space<vmem>>, %arg2: memref<128x256xbf16, #tpu.memory_space<vmem>>, %arg3: memref<1x128xf32, #tpu.memory_space<vmem>>, %arg4: memref<8x128xf32, #tpu.memory_space<vmem>>) attributes {dimension_semantics = [#tpu.dimension_semantics<parallel>], iteration_bounds = array<i64: 2>, scalar_prefetch = 0 : i64, scratch_operands = 0 : i64, tpu.core_type = #tpu.core_type<tc>, window_params = [{transform_indices = @transform_0, window_bounds = array<i64: 8, 256>}, {pipeline_mode = #tpu.pipeline_mode<synchronous>, transform_indices = @transform_1, window_bounds = array<i64: 128, 256>}, {pipeline_mode = #tpu.pipeline_mode<synchronous>, transform_indices = @transform_2, window_bounds = array<i64: 1, 128>}, {transform_indices = @transform_3, window_bounds = array<i64: 8, 128>}]} {
    %c0 = arith.constant 0 : index
    %c0_0 = arith.constant 0 : index
    %0 = vector.load %arg1[%c0, %c0_0] : memref<8x256xf32, #tpu.memory_space<vmem>>, vector<8x256xf32>
    %1 = arith.truncf %0 : vector<8x256xf32> to vector<8x256xbf16>
    %c0_1 = arith.constant 0 : index
    %c0_2 = arith.constant 0 : index
    %2 = vector.load %arg2[%c0_1, %c0_2] : memref<128x256xbf16, #tpu.memory_space<vmem>>, vector<128x256xbf16>
    %cst = arith.constant dense<0.000000e+00> : vector<8x128xf32>
    %3 = tpu.matmul %1, %2, %cst {dimension_numbers = #tpu.dot_dimension_numbers<[1], [1], [0], [0], [0, 0, 1, 0], [], []>} : vector<8x256xbf16>, vector<128x256xbf16>, vector<8x128xf32> -> vector<8x128xf32>
    %c0_3 = arith.constant 0 : index
    %c0_4 = arith.constant 0 : index
    %4 = vector.load %arg3[%c0_3, %c0_4] : memref<1x128xf32, #tpu.memory_space<vmem>>, vector<1x128xf32>
    %5 = vector.broadcast %4 : vector<1x128xf32> to vector<8x128xf32>
    %6 = arith.addf %3, %5 : vector<8x128xf32>
    %c0_5 = arith.constant 0 : index
    %c0_6 = arith.constant 0 : index
    %7 = vector.load %arg4[%c0_5, %c0_6] : memref<8x128xf32, #tpu.memory_space<vmem>>, vector<8x128xf32>
    tpu.vector_store %arg4[%c0_5, %c0_6], %6 {strides = array<i32>} : memref<8x128xf32, #tpu.memory_space<vmem>>, vector<8x128xf32>,
    return
  }
  func.func @transform_0(%arg0: i32) -> (i32, i32) {
    %c0_i32 = arith.constant 0 : i32
    %c0_i32_0 = arith.constant 0 : i32
    return %arg0, %c0_i32 : i32, i32
  }
  func.func @transform_1(%arg0: i32) -> (i32, i32) {
    %c0_i32 = arith.constant 0 : i32
    %c0_i32_0 = arith.constant 0 : i32
    %c0_i32_1 = arith.constant 0 : i32
    return %c0_i32, %c0_i32_0 : i32, i32
  }
  func.func @transform_2(%arg0: i32) -> (i32, i32) {
    %c0_i32 = arith.constant 0 : i32
    %c0_i32_0 = arith.constant 0 : i32
    %c0_i32_1 = arith.constant 0 : i32
    return %c0_i32, %c0_i32_0 : i32, i32
  }
  func.func @transform_3(%arg0: i32) -> (i32, i32) {
    %c0_i32 = arith.constant 0 : i32
    %c0_i32_0 = arith.constant 0 : i32
    return %arg0, %c0_i32 : i32, i32
  }
}

module attributes {stable_mosaic.version = 11 : i64} {
  func.func @_linear_kernel(%arg0: i32, %arg1: memref<8x256xf32, #tpu.memory_space<vmem>>, %arg2: memref<128x256xbf16, #tpu.memory_space<vmem>>, %arg3: memref<1x128xf32, #tpu.memory_space<vmem>>, %arg4: memref<8x128xf32, #tpu.memory_space<vmem>>) attributes {dimension_semantics = [#tpu.dimension_semantics<parallel>], iteration_bounds = array<i64: 2>, scalar_prefetch = 0 : i64, scratch_operands = 0 : i64, tpu.core_type = #tpu.core_type<tc>, window_params = [{transform_indices = @transform_0, window_bounds = array<i64: 8, 256>}, {pipeline_mode = #tpu.pipeline_mode<synchronous>, transform_indices = @transform_1, window_bounds = array<i64: 128, 256>}, {pipeline_mode = #tpu.pipeline_mode<synchronous>, transform_indices = @transform_2, window_bounds = array<i64: 1, 128>}, {transform_indices = @transform_3, window_bounds = array<i64: 8, 128>}]} {
    %c0 = arith.constant 0 : index
    %c0_0 = arith.constant 0 : index
    %0 = vector.load %arg1[%c0, %c0_0] : memref<8x256xf32, #tpu.memory_space<vmem>>, vector<8x256xf32>
    %1 = arith.truncf %0 : vector<8x256xf32> to vector<8x256xbf16>
    %c0_1 = arith.constant 0 : index
    %c0_2 = arith.constant 0 : index
    %2 = vector.load %arg2[%c0_1, %c0_2] : memref<128x256xbf16, #tpu.memory_space<vmem>>, vector<128x256xbf16>
    %cst = arith.constant dense<0.000000e+00> : vector<8x128xf32>
    %3 = tpu.matmul %1, %2, %cst {dimension_numbers = #tpu.dot_dimension_numbers<[1], [1], [0], [0], [0, 0, 1, 0], [], []>} : vector<8x256xbf16>, vector<128x256xbf16>, vector<8x128xf32> -> vector<8x128xf32>
    %c0_3 = arith.constant 0 : index
    %c0_4 = arith.constant 0 : index
    %4 = vector.load %arg3[%c0_3, %c0_4] : memref<1x128xf32, #tpu.memory_space<vmem>>, vector<1x128xf32>
    %5 = vector.broadcast %4 : vector<1x128xf32> to vector<8x128xf32>
    %6 = arith.addf %3, %5 : vector<8x128xf32>
    %c0_5 = arith.constant 0 : index
    %c0_6 = arith.constant 0 : index
    %7 = vector.load %arg4[%c0_5, %c0_6] : memref<8x128xf32, #tpu.memory_space<vmem>>, vector<8x128xf32>
    tpu.vector_store %arg4[%c0_5, %c0_6], %6 {strides = array<i32>} : memref<8x128xf32, #tpu.memory_space<vmem>>, vector<8x128xf32>,
    return
  }
  func.func @transform_0(%arg0: i32) -> (i32, i32) {
    %c0_i32 = arith.constant 0 : i32
    %c0_i32_0 = arith.constant 0 : i32
    return %arg0, %c0_i32 : i32, i32
  }
  func.func @transform_1(%arg0: i32) -> (i32, i32) {
    %c0_i32 = arith.constant 0 : i32
    %c0_i32_0 = arith.constant 0 : i32
    %c0_i32_1 = arith.constant 0 : i32
    return %c0_i32, %c0_i32_0 : i32, i32
  }
  func.func @transform_2(%arg0: i32) -> (i32, i32) {
    %c0_i32 = arith.constant 0 : i32
    %c0_i32_0 = arith.constant 0 : i32
    %c0_i32_1 = arith.constant 0 : i32
    return %c0_i32, %c0_i32_0 : i32, i32
  }
  func.func @transform_3(%arg0: i32) -> (i32, i32) {
    %c0_i32 = arith.constant 0 : i32
    %c0_i32_0 = arith.constant 0 : i32
    return %arg0, %c0_i32 : i32, i32
  }
}

</mosaic_0001>

<llo_original>
// kernel: tpu_custom_call.1
$region0: #{tpu_custom_call.1}
  #allocation0 [shape = 'u32[]', space=smem, size = 0x4, offset = 0x4, fixed_abs, tag = 'smem constant byte address 0x4 - core index']
  #allocation1 [shape = 'u32[144,128]{1,0:T(1,128)}', space=vmem, size = 0x12000, scoped, tag = 'internal scratch']
  %s0 = inlined_call_operand.hbm [shape: f32[13,256], index: 0, kind: input, shape index: {}]
  %s1 = inlined_call_operand.hbm [shape: bf16[128,256], index: 1, kind: input, shape index: {}]
  %s2 = inlined_call_operand.vmem [shape: f32[1,128], index: 2, kind: input, shape index: {}]
  %s3 = inlined_call_operand.hbm [shape: f32[13,128], index: 3, kind: output, shape index: {}]
  %s4 = sld [smem:[#allocation0]]
  $region53: #{tpu_custom_call.1} parent=0
    _
  %s6 = ssub.s32 1, %s4
  %s7 = scalar_select 0, %s6, %s4
  $region1: #{tpu_custom_call.1} parent=0
    #allocation2 [shape = 'u8[16384]{0}', space=vmem, size = 0x4000, scoped, tag = 'input window, operand 0']
    #allocation3 [shape = 's32[2]{0}', space=sflag, size = 0x8, scoped, tag = 'scoped memory for tpu_custom_call.1']
    #allocation4 [shape = 's32[2]{0}', space=sflag, size = 0x8, scoped, tag = 'scoped memory for tpu_custom_call.1']
    #allocation5 [shape = 'u8[65536]{0}', space=vmem, size = 0x10000, scoped, tag = 'input window, operand 1, single buffered']
    #allocation6 [shape = 's32[1]{0}', space=sflag, size = 0x4, scoped, tag = 'scoped memory for tpu_custom_call.1']
    #allocation7 [shape = 'u8[8192]{0}', space=vmem, size = 0x2000, scoped, tag = 'output window, operand 0']
    %8 = vsyncpa [#allocation3], 0
    %s9 = scalar_lea.sflag [#allocation3], 1
    %10 = vsyncpa %s9, 0
    %11 = vsyncpa [#allocation6], 0
    %12 = vsyncpa [#allocation4], 0
    %s13 = scalar_lea.sflag [#allocation4], 1
    %14 = vsyncpa %s13, 0
    loop: start=0, step=1, limit=4
    $region2: #{tpu_custom_call.1} parent=1 // loop_pre_header
      _
    $region3: #{tpu_custom_call.1} parent=1 // loop_header
      %s16 = sphi 0, %s20
      %p17 = scmp.ge.s32.totalorder %s16, 4
      %s26 = sphi 0, %s28
      %s29 = sphi 0, %s26
      %s30 = sphi 0, %s29
      %s46 = sphi 0, %s30
      %s50 = sphi 0, %s50
      %s52 = sphi 0, %s50
      %s53 = sphi 0, %s52
      %s67 = sphi 0, %s53
      %s71 = sphi 0, %s71
      %s73 = sphi 0, %s71
      %s74 = sphi 0, %s73
      %s88 = sphi 0, %s74
      %s94 = sphi 0, %s96
      %s97 = sphi 0, %s94
      %s98 = sphi 0, %s97
      %s114 = sphi 0, %s98
    $region4: #{tpu_custom_call.1} parent=1 // loop_header_branch
      %19 = sbr.rel (%p17) target = $region8
    $region5: #{tpu_custom_call.1} parent=1 // loop_body
      %s21 = ssub.s32 %s16, 1
      %s22 = ssub.s32 %s16, 2
      %s23 = sadd.s32 %s16, 1
      %s24 = ssub.s32 %s16, %s23
      %p25 = scmp.eq.s32.totalorder %s24, 0
      %s27 = sadd.s32 %s26, 1
      %s28 = scalar_select %p25, %s26, %s27
      %p31 = pneg %p25
      %p32 = scmp.eq.s32.totalorder %s16, 1
      %p33 = por %p31, %p32
      %p34 = scmp.ne.s32.totalorder %s26, %s29
      %p35 = scmp.eq.s32.totalorder %s16, 0
      %p36 = por %p34, %p35
      %p37 = scmp.ne.s32.totalorder %s26, %s29
      %p38 = scmp.eq.s32.totalorder %s21, 1
      %p39 = por %p37, %p38
      %p40 = scmp.ne.s32.totalorder %s29, %s30
      %p41 = scmp.eq.s32.totalorder %s21, 0
      %p42 = por %p40, %p41
      %p43 = scmp.ne.s32.totalorder %s29, %s30
      %p44 = scmp.eq.s32.totalorder %s22, 1
      %p45 = por %p43, %p44
      %p47 = scmp.ne.s32.totalorder %s30, %s46
      %p48 = scmp.eq.s32.totalorder %s22, 0
      %p49 = por %p47, %p48
      %s51 = sadd.s32 %s50, 1
      %p54 = scmp.eq.s32.totalorder %s16, 1
      %p55 = scmp.ne.s32.totalorder %s50, %s52
      %p56 = scmp.eq.s32.totalorder %s16, 0
      %p57 = por %p55, %p56
      %p58 = scmp.ne.s32.totalorder %s50, %s52
      %p59 = scmp.eq.s32.totalorder %s21, 1
      %p60 = por %p58, %p59
      %p61 = scmp.ne.s32.totalorder %s52, %s53
      %p62 = scmp.eq.s32.totalorder %s21, 0
      %p63 = por %p61, %p62
      %p64 = scmp.ne.s32.totalorder %s52, %s53
      %p65 = scmp.eq.s32.totalorder %s22, 1
      %p66 = por %p64, %p65
      %p68 = scmp.ne.s32.totalorder %s53, %s67
      %p69 = scmp.eq.s32.totalorder %s22, 0
      %p70 = por %p68, %p69
      %s72 = sadd.s32 %s71, 1
      %p75 = scmp.eq.s32.totalorder %s16, 1
      %p76 = scmp.ne.s32.totalorder %s71, %s73
      %p77 = scmp.eq.s32.totalorder %s16, 0
      %p78 = por %p76, %p77
      %p79 = scmp.ne.s32.totalorder %s71, %s73
      %p80 = scmp.eq.s32.totalorder %s21, 1
      %p81 = por %p79, %p80
      %p82 = scmp.ne.s32.totalorder %s73, %s74
      %p83 = scmp.eq.s32.totalorder %s21, 0
      %p84 = por %p82, %p83
      %p85 = scmp.ne.s32.totalorder %s73, %s74
      %p86 = scmp.eq.s32.totalorder %s22, 1
      %p87 = por %p85, %p86
      %p89 = scmp.ne.s32.totalorder %s74, %s88
      %p90 = scmp.eq.s32.totalorder %s22, 0
      %p91 = por %p89, %p90
      %s92 = ssub.s32 %s16, %s23
      %p93 = scmp.eq.s32.totalorder %s92, 0
      %s95 = sadd.s32 %s94, 1
      %s96 = scalar_select %p93, %s94, %s95
      %p99 = pneg %p93
      %p100 = scmp.eq.s32.totalorder %s16, 1
      %p101 = por %p99, %p100
      %p102 = scmp.ne.s32.totalorder %s94, %s97
      %p103 = scmp.eq.s32.totalorder %s16, 0
      %p104 = por %p102, %p103
      %p105 = scmp.ne.s32.totalorder %s94, %s97
      %p106 = scmp.eq.s32.totalorder %s21, 1
      %p107 = por %p105, %p106
      %p108 = scmp.ne.s32.totalorder %s97, %s98
      %p109 = scmp.eq.s32.totalorder %s21, 0
      %p110 = por %p108, %p109
      %p111 = scmp.ne.s32.totalorder %s97, %s98
      %p112 = scmp.eq.s32.totalorder %s22, 1
      %p113 = por %p111, %p112
      %p115 = scmp.ne.s32.totalorder %s98, %s114
      %p116 = scmp.eq.s32.totalorder %s22, 0
      %p117 = por %p115, %p116
      %p118 = scmp.le.s32.totalorder 1, %s16
      %p119 = scmp.lt.s32.totalorder %s16, 3
      %p120 = pnand %p118, %p119
      %p121 = pneg %p120
      // Predicated region
      $region9: #{tpu_custom_call.1} parent=5 // pred_check
        _
      $region10: #{tpu_custom_call.1} parent=5 // pred_check_branch
        %123 = sbr.rel (%p120) target = $region12
      $region11: #{tpu_custom_call.1} parent=5 // pred_region
        %s124 = ssub.s32 %s16, 1
        // Predicated region
        $region13: #{tpu_custom_call.1} parent=11 // pred_check
          %p125 = pneg %p63
        $region14: #{tpu_custom_call.1} parent=11 // pred_check_branch
          %127 = sbr.rel (%p125) target = $region16
        $region15: #{tpu_custom_call.1} parent=11 // pred_region
          %s129 = ssub.s32 2048, 2048
          %130 = vsyncadd [#allocation6], %s129
          %s131 = sshll.u32 [#allocation5], 4
          %s132 = int_to_ptr.vmem [resolvable:$true] %s131
          %137 = dma.hbm_to_vmem [thread:$0]  %s1, 2048, %s132, [#allocation6], 128, 128, 8
        $region16: #{tpu_custom_call.1} parent=11 // pred_fallthru
          _
        // Predicated region
        $region17: #{tpu_custom_call.1} parent=11 // pred_check
          %p138 = pneg %p84
        $region18: #{tpu_custom_call.1} parent=11 // pred_check_branch
          %140 = sbr.rel (%p138) target = $region20
        $region19: #{tpu_custom_call.1} parent=11 // pred_region
          _
        $region20: #{tpu_custom_call.1} parent=11 // pred_fallthru
          _
      $region12: #{tpu_custom_call.1} parent=5 // pred_fallthru
        _
      %p141 = scmp.lt.s32.totalorder %s16, 2
      // Predicated region
      $region21: #{tpu_custom_call.1} parent=5 // pred_check
        %p142 = pneg %p141
      $region22: #{tpu_custom_call.1} parent=5 // pred_check_branch
        %144 = sbr.rel (%p142) target = $region24
      $region23: #{tpu_custom_call.1} parent=5 // pred_region
        // Predicated region
        $region25: #{tpu_custom_call.1} parent=23 // pred_check
          %p145 = pneg %p36
        $region26: #{tpu_custom_call.1} parent=23 // pred_check_branch
          %147 = sbr.rel (%p145) target = $region28
        $region27: #{tpu_custom_call.1} parent=23 // pred_region
          %s148 = sand.u32 %s26, 1
          %s149 = scalar_lea.sflag [#allocation3], %s148
          %s150 = sand.u32 %s26, 1
          %s151 = smul.addr %s150, 16
          %s152 = scalar_lea.vmem [#allocation2], %s151
          %s154 = ssub.s32 256, 256
          %155 = vsyncadd %s149, %s154
          %s156 = smul.addr %s16, 2
          %s157 = smul.addr %s156, 128
          %s158 = scalar_lea.hbm %s0, %s157
          %s160 = sshll.u32 %s152, 4
          %s161 = int_to_ptr.vmem [resolvable:$true] %s160
          %163 = dma.hbm_to_vmem [thread:$0]  %s158, 256, %s161, %s149
        $region28: #{tpu_custom_call.1} parent=23 // pred_fallthru
          _
      $region24: #{tpu_custom_call.1} parent=5 // pred_fallthru
        _
      %p164 = scmp.le.s32.totalorder 1, %s16
      %p165 = scmp.lt.s32.totalorder %s16, 3
      %p166 = pnand %p164, %p165
      %p167 = pneg %p166
      // Predicated region
      $region29: #{tpu_custom_call.1} parent=5 // pred_check
        _
      $region30: #{tpu_custom_call.1} parent=5 // pred_check_branch
        %169 = sbr.rel (%p166) target = $region32
      $region31: #{tpu_custom_call.1} parent=5 // pred_region
        %s170 = ssub.s32 %s16, 1
        %s171 = sand.u32 %s29, 1
        %s172 = scalar_lea.sflag [#allocation3], %s171
        %s173 = sand.u32 %s29, 1
        %s174 = smul.addr %s173, 16
        %s175 = scalar_lea.vmem [#allocation2], %s174
        // Predicated region
        $region33: #{tpu_custom_call.1} parent=31 // pred_check
          %p176 = pneg %p42
        $region34: #{tpu_custom_call.1} parent=31 // pred_check_branch
          %178 = sbr.rel (%p176) target = $region36
        $region35: #{tpu_custom_call.1} parent=31 // pred_region
          %179 = dma.done %s172, 256
        $region36: #{tpu_custom_call.1} parent=31 // pred_fallthru
          _
        // Predicated region
        $region37: #{tpu_custom_call.1} parent=31 // pred_check
          %p180 = pneg %p63
        $region38: #{tpu_custom_call.1} parent=31 // pred_check_branch
          %182 = sbr.rel (%p180) target = $region40
        $region39: #{tpu_custom_call.1} parent=31 // pred_region
          %183 = dma.done [#allocation6], 2048
        $region40: #{tpu_custom_call.1} parent=31 // pred_fallthru
          _
        %s184 = sand.u32 %s29, 1
        %s185 = scalar_lea.sflag [#allocation3], %s184
        %s186 = sand.u32 %s29, 1
        %s187 = smul.addr %s186, 16
        %s188 = scalar_lea.vmem [#allocation2], %s187
        %p189 = pneg %p42
        %p190 = pneg %p39
        %p191 = pneg %p63
        %p192 = pneg %p60
        %p193 = pneg %p84
        %p194 = pneg %p81
        %p195 = pneg %p110
        %p196 = pneg %p107
        %s197 = sand.u32 %s97, 1
        %s198 = scalar_lea.sflag [#allocation4], %s197
        %s199 = sand.u32 %s97, 1
        %s200 = smul.addr %s199, 8
        %s201 = scalar_lea.vmem [#allocation7], %s200
        %v203 = vld [vmem:[%s175] sm:$0xff]
        %v204 = vld [vmem:[%s175 + $0x8] sm:$0xff]
        %v205 = vpack.c.bf16 %v203, %v203
        %v206 = vpack.c.bf16 %v204, %v204
        %v207 = vld [vmem:[#allocation5] sm:$0xff]
        %v208 = vld [vmem:[#allocation5 + $0x8] sm:$0xff]
        %v209 = vld [vmem:[#allocation5 + $0x10] sm:$0xff]
        %v210 = vld [vmem:[#allocation5 + $0x18] sm:$0xff]
        %v211 = vld [vmem:[#allocation5 + $0x20] sm:$0xff]
        %v212 = vld [vmem:[#allocation5 + $0x28] sm:$0xff]
        %v213 = vld [vmem:[#allocation5 + $0x30] sm:$0xff]
        %v214 = vld [vmem:[#allocation5 + $0x38] sm:$0xff]
        %v215 = vld [vmem:[#allocation5 + $0x40] sm:$0xff]
        %v216 = vld [vmem:[#allocation5 + $0x48] sm:$0xff]
        %v217 = vld [vmem:[#allocation5 + $0x50] sm:$0xff]
        %v218 = vld [vmem:[#allocation5 + $0x58] sm:$0xff]
        %v219 = vld [vmem:[#allocation5 + $0x60] sm:$0xff]
        %v220 = vld [vmem:[#allocation5 + $0x68] sm:$0xff]
        %v221 = vld [vmem:[#allocation5 + $0x70] sm:$0xff]
        %v222 = vld [vmem:[#allocation5 + $0x78] sm:$0xff]
        %v223 = vld [vmem:[%s2] sm:$0x1]
        %v225 = vlaneseq
        %v226 = vshrl.u32 %v225, 7
        %v227 = vsub.s32 0, %v226
        %v228 = vrot.slane %v223, %v227
        %v246 = vunpack.c.l.b16 %v207
        %v247 = vunpack.c.h.b16 %v207
        %v248 = vunpack.c.l.b16 %v208
        %v249 = vunpack.c.h.b16 %v208
        %v250 = vunpack.c.l.b16 %v209
        %v251 = vunpack.c.h.b16 %v209
        %v252 = vunpack.c.l.b16 %v210
        %v253 = vunpack.c.h.b16 %v210
        %v254 = vunpack.c.l.b16 %v211
        %v255 = vunpack.c.h.b16 %v211
        %v256 = vunpack.c.l.b16 %v212
        %v257 = vunpack.c.h.b16 %v212
        %v258 = vunpack.c.l.b16 %v213
        %v259 = vunpack.c.h.b16 %v213
        %v260 = vunpack.c.l.b16 %v214
        %v261 = vunpack.c.h.b16 %v214
        %v262 = vunpack.c.l.b16 %v215
        %v263 = vunpack.c.h.b16 %v215
        %v264 = vunpack.c.l.b16 %v216
        %v265 = vunpack.c.h.b16 %v216
        %v266 = vunpack.c.l.b16 %v217
        %v267 = vunpack.c.h.b16 %v217
        %v268 = vunpack.c.l.b16 %v218
        %v269 = vunpack.c.h.b16 %v218
        %v270 = vunpack.c.l.b16 %v219
        %v271 = vunpack.c.h.b16 %v219
        %v272 = vunpack.c.l.b16 %v220
        %v273 = vunpack.c.h.b16 %v220
        %v274 = vunpack.c.l.b16 %v221
        %v275 = vunpack.c.h.b16 %v221
        %v276 = vunpack.c.l.b16 %v222
        %v277 = vunpack.c.h.b16 %v222
        %v278 = vpack.c.b16 %v248, %v246
        %v279 = vpack.c.b16 %v249, %v247
        %v280 = vpack.c.b16 %v252, %v250
        %v281 = vpack.c.b16 %v253, %v251
        %v282 = vpack.c.b16 %v256, %v254
        %v283 = vpack.c.b16 %v257, %v255
        %v284 = vpack.c.b16 %v260, %v258
        %v285 = vpack.c.b16 %v261, %v259
        %v286 = vpack.c.b16 %v264, %v262
        %v287 = vpack.c.b16 %v265, %v263
        %v288 = vpack.c.b16 %v268, %v266
        %v289 = vpack.c.b16 %v269, %v267
        %v290 = vpack.c.b16 %v272, %v270
        %v291 = vpack.c.b16 %v273, %v271
        %v292 = vpack.c.b16 %v276, %v274
        %v293 = vpack.c.b16 %v277, %v275
        %310 = vmatprep.subr.bf16.mxu0 %v279
        %311 = vmatpush1.bf16.xpose.msra.mxu0 %v278
        %312 = vmatprep.subr.bf16.mxu0 %v281
        %313 = vmatpush1.bf16.xpose.msra.mxu0 %v280
        %314 = vmatprep.subr.bf16.mxu0 %v283
        %315 = vmatpush1.bf16.xpose.msra.mxu0 %v282
        %316 = vmatprep.subr.bf16.mxu0 %v285
        %317 = vmatpush1.bf16.xpose.msra.mxu0 %v284
        %318 = vmatprep.subr.bf16.mxu0 %v287
        %319 = vmatpush1.bf16.xpose.msra.mxu0 %v286
        %320 = vmatprep.subr.bf16.mxu0 %v289
        %321 = vmatpush1.bf16.xpose.msra.mxu0 %v288
        %322 = vmatprep.subr.bf16.mxu0 %v291
        %323 = vmatpush1.bf16.xpose.msra.mxu0 %v290
        %324 = vmatprep.subr.bf16.mxu0 %v293
        %325 = vmatpush1.bf16.xpose.msra.mxu0 %v292
        %326 = vmatprep.subr.bf16.mxu0 0
        %327 = vmatpush1.bf16.xpose.msra.mxu0 0
        %328 = vmatprep.subr.bf16.mxu0 0
        %329 = vmatpush1.bf16.xpose.msra.mxu0 0
        %330 = vmatprep.subr.bf16.mxu0 0
        %331 = vmatpush1.bf16.xpose.msra.mxu0 0
        %332 = vmatprep.subr.bf16.mxu0 0
        %333 = vmatpush1.bf16.xpose.msra.mxu0 0
        %334 = vmatprep.subr.bf16.mxu0 0
        %335 = vmatpush1.bf16.xpose.msra.mxu0 0
        %336 = vmatprep.subr.bf16.mxu0 0
        %337 = vmatpush1.bf16.xpose.msra.mxu0 0
        %338 = vmatprep.subr.bf16.mxu0 0
        %339 = vmatpush1.bf16.xpose.msra.mxu0 0
        %340 = vmatprep.subr.bf16.mxu0 0
        %341 = vmatpush1.bf16.xpose.msra.mxu0 0
        %342 = vmatprep.mubr.bf16.mxu0 %v206
        %343 = vmatmul.mubr.bf16.gmra.mrb[0].mxu0 %v205
        %v344 = vpop.f32.mrb[0].mxu0
        %v345 = vadd.f32 %v228, %v344
        %v346 = vpop.f32.mrb[0].mxu0
        %v347 = vpop.f32.mrb[0].mxu0
        %v348 = vpop.f32.mrb[0].mxu0
        %349 = vdwg.mxu0
        %350 = vst [vmem:[%s201] sm:$0xff] %v345
        %s351 = sand.u32 %s97, 1
        %s352 = scalar_lea.sflag [#allocation4], %s351
        %s353 = sand.u32 %s97, 1
        %s354 = smul.addr %s353, 8
        %s355 = scalar_lea.vmem [#allocation7], %s354
        // Predicated region
        $region41: #{tpu_custom_call.1} parent=31 // pred_check
          %p356 = pneg %p107
        $region42: #{tpu_custom_call.1} parent=31 // pred_check_branch
          %358 = sbr.rel (%p356) target = $region44
        $region43: #{tpu_custom_call.1} parent=31 // pred_region
          %s360 = ssub.s32 128, 128
          %361 = vsyncadd %s352, %s360
          %s362 = smul.addr %s21, 128
          %s363 = scalar_lea.hbm %s3, %s362
          %s365 = sshll.u32 %s355, 4
          %s366 = int_to_ptr.vmem [resolvable:$true] %s365
          %368 = dma.vmem_to_hbm [thread:$0]  %s366, 128, %s363, %s352
        $region44: #{tpu_custom_call.1} parent=31 // pred_fallthru
          _
      $region32: #{tpu_custom_call.1} parent=5 // pred_fallthru
        _
      %p369 = scmp.le.s32.totalorder 2, %s16
      // Predicated region
      $region45: #{tpu_custom_call.1} parent=5 // pred_check
        %p370 = pneg %p369
      $region46: #{tpu_custom_call.1} parent=5 // pred_check_branch
        %372 = sbr.rel (%p370) target = $region48
      $region47: #{tpu_custom_call.1} parent=5 // pred_region
        %s373 = ssub.s32 %s16, 2
        // Predicated region
        $region49: #{tpu_custom_call.1} parent=47 // pred_check
          %p374 = pneg %p113
        $region50: #{tpu_custom_call.1} parent=47 // pred_check_branch
          %376 = sbr.rel (%p374) target = $region52
        $region51: #{tpu_custom_call.1} parent=47 // pred_region
          %s377 = sand.u32 %s98, 1
          %s378 = scalar_lea.sflag [#allocation4], %s377
          %s379 = sand.u32 %s98, 1
          %s380 = smul.addr %s379, 8
          %s381 = scalar_lea.vmem [#allocation7], %s380
          %382 = dma.done %s378, 128
        $region52: #{tpu_custom_call.1} parent=47 // pred_fallthru
          _
      $region48: #{tpu_custom_call.1} parent=5 // pred_fallthru
        _
    $region6: #{tpu_custom_call.1} parent=1 // loop_footer
      %s20 = sadd.s32 1, %s16
    $region7: #{tpu_custom_call.1} parent=1 // loop_footer_branch
      %15 = sbr.rel target = $region3
    $region8: #{tpu_custom_call.1} parent=1 // loop_exit
      _
    %383 = vsyncpa [#allocation3], 1
    %s384 = scalar_lea.sflag [#allocation3], 1
    %385 = vsyncpa %s384, 1
    %386 = vsyncpa [#allocation6], 1
    %387 = vsyncpa [#allocation4], 1
    %s388 = scalar_lea.sflag [#allocation4], 1
    %389 = vsyncpa %s388, 1

// kernel: tpu_custom_call.1
$region0: #{tpu_custom_call.1}
  #allocation0 [shape = 'u32[]', space=smem, size = 0x4, offset = 0x4, fixed_abs, tag = 'smem constant byte address 0x4 - core index']
  #allocation1 [shape = 'u32[144,128]{1,0:T(1,128)}', space=vmem, size = 0x12000, scoped, tag = 'internal scratch']
  %s0 = inlined_call_operand.hbm [shape: f32[13,256], index: 0, kind: input, shape index: {}]
  %s1 = inlined_call_operand.hbm [shape: bf16[128,256], index: 1, kind: input, shape index: {}]
  %s2 = inlined_call_operand.vmem [shape: f32[1,128], index: 2, kind: input, shape index: {}]
  %s3 = inlined_call_operand.hbm [shape: f32[13,128], index: 3, kind: output, shape index: {}]
  %s4 = sld [smem:[#allocation0]]
  $region53: #{tpu_custom_call.1} parent=0
    _
  %s6 = ssub.s32 1, %s4
  %s7 = scalar_select 0, %s6, %s4
  $region1: #{tpu_custom_call.1} parent=0
    #allocation2 [shape = 'u8[16384]{0}', space=vmem, size = 0x4000, scoped, tag = 'input window, operand 0']
    #allocation3 [shape = 's32[2]{0}', space=sflag, size = 0x8, scoped, tag = 'scoped memory for tpu_custom_call.1']
    #allocation4 [shape = 's32[2]{0}', space=sflag, size = 0x8, scoped, tag = 'scoped memory for tpu_custom_call.1']
    #allocation5 [shape = 'u8[65536]{0}', space=vmem, size = 0x10000, scoped, tag = 'input window, operand 1, single buffered']
    #allocation6 [shape = 's32[1]{0}', space=sflag, size = 0x4, scoped, tag = 'scoped memory for tpu_custom_call.1']
    #allocation7 [shape = 'u8[8192]{0}', space=vmem, size = 0x2000, scoped, tag = 'output window, operand 0']
    %8 = vsyncpa [#allocation3], 0
    %s9 = scalar_lea.sflag [#allocation3], 1
    %10 = vsyncpa %s9, 0
    %11 = vsyncpa [#allocation6], 0
    %12 = vsyncpa [#allocation4], 0
    %s13 = scalar_lea.sflag [#allocation4], 1
    %14 = vsyncpa %s13, 0
    loop: start=0, step=1, limit=4
    $region2: #{tpu_custom_call.1} parent=1 // loop_pre_header
      _
    $region3: #{tpu_custom_call.1} parent=1 // loop_header
      %s16 = sphi 0, %s20
      %p17 = scmp.ge.s32.totalorder %s16, 4
      %s26 = sphi 0, %s28
      %s29 = sphi 0, %s26
      %s30 = sphi 0, %s29
      %s46 = sphi 0, %s30
      %s50 = sphi 0, %s50
      %s52 = sphi 0, %s50
      %s53 = sphi 0, %s52
      %s67 = sphi 0, %s53
      %s71 = sphi 0, %s71
      %s73 = sphi 0, %s71
      %s74 = sphi 0, %s73
      %s88 = sphi 0, %s74
      %s94 = sphi 0, %s96
      %s97 = sphi 0, %s94
      %s98 = sphi 0, %s97
      %s114 = sphi 0, %s98
    $region4: #{tpu_custom_call.1} parent=1 // loop_header_branch
      %19 = sbr.rel (%p17) target = $region8
    $region5: #{tpu_custom_call.1} parent=1 // loop_body
      %s21 = ssub.s32 %s16, 1
      %s22 = ssub.s32 %s16, 2
      %s23 = sadd.s32 %s16, 1
      %s24 = ssub.s32 %s16, %s23
      %p25 = scmp.eq.s32.totalorder %s24, 0
      %s27 = sadd.s32 %s26, 1
      %s28 = scalar_select %p25, %s26, %s27
      %p31 = pneg %p25
      %p32 = scmp.eq.s32.totalorder %s16, 1
      %p33 = por %p31, %p32
      %p34 = scmp.ne.s32.totalorder %s26, %s29
      %p35 = scmp.eq.s32.totalorder %s16, 0
      %p36 = por %p34, %p35
      %p37 = scmp.ne.s32.totalorder %s26, %s29
      %p38 = scmp.eq.s32.totalorder %s21, 1
      %p39 = por %p37, %p38
      %p40 = scmp.ne.s32.totalorder %s29, %s30
      %p41 = scmp.eq.s32.totalorder %s21, 0
      %p42 = por %p40, %p41
      %p43 = scmp.ne.s32.totalorder %s29, %s30
      %p44 = scmp.eq.s32.totalorder %s22, 1
      %p45 = por %p43, %p44
      %p47 = scmp.ne.s32.totalorder %s30, %s46
      %p48 = scmp.eq.s32.totalorder %s22, 0
      %p49 = por %p47, %p48
      %s51 = sadd.s32 %s50, 1
      %p54 = scmp.eq.s32.totalorder %s16, 1
      %p55 = scmp.ne.s32.totalorder %s50, %s52
      %p56 = scmp.eq.s32.totalorder %s16, 0
      %p57 = por %p55, %p56
      %p58 = scmp.ne.s32.totalorder %s50, %s52
      %p59 = scmp.eq.s32.totalorder %s21, 1
      %p60 = por %p58, %p59
      %p61 = scmp.ne.s32.totalorder %s52, %s53
      %p62 = scmp.eq.s32.totalorder %s21, 0
      %p63 = por %p61, %p62
      %p64 = scmp.ne.s32.totalorder %s52, %s53
      %p65 = scmp.eq.s32.totalorder %s22, 1
      %p66 = por %p64, %p65
      %p68 = scmp.ne.s32.totalorder %s53, %s67
      %p69 = scmp.eq.s32.totalorder %s22, 0
      %p70 = por %p68, %p69
      %s72 = sadd.s32 %s71, 1
      %p75 = scmp.eq.s32.totalorder %s16, 1
      %p76 = scmp.ne.s32.totalorder %s71, %s73
      %p77 = scmp.eq.s32.totalorder %s16, 0
      %p78 = por %p76, %p77
      %p79 = scmp.ne.s32.totalorder %s71, %s73
      %p80 = scmp.eq.s32.totalorder %s21, 1
      %p81 = por %p79, %p80
      %p82 = scmp.ne.s32.totalorder %s73, %s74
      %p83 = scmp.eq.s32.totalorder %s21, 0
      %p84 = por %p82, %p83
      %p85 = scmp.ne.s32.totalorder %s73, %s74
      %p86 = scmp.eq.s32.totalorder %s22, 1
      %p87 = por %p85, %p86
      %p89 = scmp.ne.s32.totalorder %s74, %s88
      %p90 = scmp.eq.s32.totalorder %s22, 0
      %p91 = por %p89, %p90
      %s92 = ssub.s32 %s16, %s23
      %p93 = scmp.eq.s32.totalorder %s92, 0
      %s95 = sadd.s32 %s94, 1
      %s96 = scalar_select %p93, %s94, %s95
      %p99 = pneg %p93
      %p100 = scmp.eq.s32.totalorder %s16, 1
      %p101 = por %p99, %p100
      %p102 = scmp.ne.s32.totalorder %s94, %s97
      %p103 = scmp.eq.s32.totalorder %s16, 0
      %p104 = por %p102, %p103
      %p105 = scmp.ne.s32.totalorder %s94, %s97
      %p106 = scmp.eq.s32.totalorder %s21, 1
      %p107 = por %p105, %p106
      %p108 = scmp.ne.s32.totalorder %s97, %s98
      %p109 = scmp.eq.s32.totalorder %s21, 0
      %p110 = por %p108, %p109
      %p111 = scmp.ne.s32.totalorder %s97, %s98
      %p112 = scmp.eq.s32.totalorder %s22, 1
      %p113 = por %p111, %p112
      %p115 = scmp.ne.s32.totalorder %s98, %s114
      %p116 = scmp.eq.s32.totalorder %s22, 0
      %p117 = por %p115, %p116
      %p118 = scmp.le.s32.totalorder 1, %s16
      %p119 = scmp.lt.s32.totalorder %s16, 3
      %p120 = pnand %p118, %p119
      %p121 = pneg %p120
      // Predicated region
      $region9: #{tpu_custom_call.1} parent=5 // pred_check
        _
      $region10: #{tpu_custom_call.1} parent=5 // pred_check_branch
        %123 = sbr.rel (%p120) target = $region12
      $region11: #{tpu_custom_call.1} parent=5 // pred_region
        %s124 = ssub.s32 %s16, 1
        // Predicated region
        $region13: #{tpu_custom_call.1} parent=11 // pred_check
          %p125 = pneg %p63
        $region14: #{tpu_custom_call.1} parent=11 // pred_check_branch
          %127 = sbr.rel (%p125) target = $region16
        $region15: #{tpu_custom_call.1} parent=11 // pred_region
          %s129 = ssub.s32 2048, 2048
          %130 = vsyncadd [#allocation6], %s129
          %s131 = sshll.u32 [#allocation5], 4
          %s132 = int_to_ptr.vmem [resolvable:$true] %s131
          %137 = dma.hbm_to_vmem [thread:$0]  %s1, 2048, %s132, [#allocation6], 128, 128, 8
        $region16: #{tpu_custom_call.1} parent=11 // pred_fallthru
          _
        // Predicated region
        $region17: #{tpu_custom_call.1} parent=11 // pred_check
          %p138 = pneg %p84
        $region18: #{tpu_custom_call.1} parent=11 // pred_check_branch
          %140 = sbr.rel (%p138) target = $region20
        $region19: #{tpu_custom_call.1} parent=11 // pred_region
          _
        $region20: #{tpu_custom_call.1} parent=11 // pred_fallthru
          _
      $region12: #{tpu_custom_call.1} parent=5 // pred_fallthru
        _
      %p141 = scmp.lt.s32.totalorder %s16, 2
      // Predicated region
      $region21: #{tpu_custom_call.1} parent=5 // pred_check
        %p142 = pneg %p141
      $region22: #{tpu_custom_call.1} parent=5 // pred_check_branch
        %144 = sbr.rel (%p142) target = $region24
      $region23: #{tpu_custom_call.1} parent=5 // pred_region
        // Predicated region
        $region25: #{tpu_custom_call.1} parent=23 // pred_check
          %p145 = pneg %p36
        $region26: #{tpu_custom_call.1} parent=23 // pred_check_branch
          %147 = sbr.rel (%p145) target = $region28
        $region27: #{tpu_custom_call.1} parent=23 // pred_region
          %s148 = sand.u32 %s26, 1
          %s149 = scalar_lea.sflag [#allocation3], %s148
          %s150 = sand.u32 %s26, 1
          %s151 = smul.addr %s150, 16
          %s152 = scalar_lea.vmem [#allocation2], %s151
          %s154 = ssub.s32 256, 256
          %155 = vsyncadd %s149, %s154
          %s156 = smul.addr %s16, 2
          %s157 = smul.addr %s156, 128
          %s158 = scalar_lea.hbm %s0, %s157
          %s160 = sshll.u32 %s152, 4
          %s161 = int_to_ptr.vmem [resolvable:$true] %s160
          %163 = dma.hbm_to_vmem [thread:$0]  %s158, 256, %s161, %s149
        $region28: #{tpu_custom_call.1} parent=23 // pred_fallthru
          _
      $region24: #{tpu_custom_call.1} parent=5 // pred_fallthru
        _
      %p164 = scmp.le.s32.totalorder 1, %s16
      %p165 = scmp.lt.s32.totalorder %s16, 3
      %p166 = pnand %p164, %p165
      %p167 = pneg %p166
      // Predicated region
      $region29: #{tpu_custom_call.1} parent=5 // pred_check
        _
      $region30: #{tpu_custom_call.1} parent=5 // pred_check_branch
        %169 = sbr.rel (%p166) target = $region32
      $region31: #{tpu_custom_call.1} parent=5 // pred_region
        %s170 = ssub.s32 %s16, 1
        %s171 = sand.u32 %s29, 1
        %s172 = scalar_lea.sflag [#allocation3], %s171
        %s173 = sand.u32 %s29, 1
        %s174 = smul.addr %s173, 16
        %s175 = scalar_lea.vmem [#allocation2], %s174
        // Predicated region
        $region33: #{tpu_custom_call.1} parent=31 // pred_check
          %p176 = pneg %p42
        $region34: #{tpu_custom_call.1} parent=31 // pred_check_branch
          %178 = sbr.rel (%p176) target = $region36
        $region35: #{tpu_custom_call.1} parent=31 // pred_region
          %179 = dma.done %s172, 256
        $region36: #{tpu_custom_call.1} parent=31 // pred_fallthru
          _
        // Predicated region
        $region37: #{tpu_custom_call.1} parent=31 // pred_check
          %p180 = pneg %p63
        $region38: #{tpu_custom_call.1} parent=31 // pred_check_branch
          %182 = sbr.rel (%p180) target = $region40
        $region39: #{tpu_custom_call.1} parent=31 // pred_region
          %183 = dma.done [#allocation6], 2048
        $region40: #{tpu_custom_call.1} parent=31 // pred_fallthru
          _
        %s184 = sand.u32 %s29, 1
        %s185 = scalar_lea.sflag [#allocation3], %s184
        %s186 = sand.u32 %s29, 1
        %s187 = smul.addr %s186, 16
        %s188 = scalar_lea.vmem [#allocation2], %s187
        %p189 = pneg %p42
        %p190 = pneg %p39
        %p191 = pneg %p63
        %p192 = pneg %p60
        %p193 = pneg %p84
        %p194 = pneg %p81
        %p195 = pneg %p110
        %p196 = pneg %p107
        %s197 = sand.u32 %s97, 1
        %s198 = scalar_lea.sflag [#allocation4], %s197
        %s199 = sand.u32 %s97, 1
        %s200 = smul.addr %s199, 8
        %s201 = scalar_lea.vmem [#allocation7], %s200
        %v203 = vld [vmem:[%s175] sm:$0xff]
        %v204 = vld [vmem:[%s175 + $0x8] sm:$0xff]
        %v205 = vpack.c.bf16 %v203, %v203
        %v206 = vpack.c.bf16 %v204, %v204
        %v207 = vld [vmem:[#allocation5] sm:$0xff]
        %v208 = vld [vmem:[#allocation5 + $0x8] sm:$0xff]
        %v209 = vld [vmem:[#allocation5 + $0x10] sm:$0xff]
        %v210 = vld [vmem:[#allocation5 + $0x18] sm:$0xff]
        %v211 = vld [vmem:[#allocation5 + $0x20] sm:$0xff]
        %v212 = vld [vmem:[#allocation5 + $0x28] sm:$0xff]
        %v213 = vld [vmem:[#allocation5 + $0x30] sm:$0xff]
        %v214 = vld [vmem:[#allocation5 + $0x38] sm:$0xff]
        %v215 = vld [vmem:[#allocation5 + $0x40] sm:$0xff]
        %v216 = vld [vmem:[#allocation5 + $0x48] sm:$0xff]
        %v217 = vld [vmem:[#allocation5 + $0x50] sm:$0xff]
        %v218 = vld [vmem:[#allocation5 + $0x58] sm:$0xff]
        %v219 = vld [vmem:[#allocation5 + $0x60] sm:$0xff]
        %v220 = vld [vmem:[#allocation5 + $0x68] sm:$0xff]
        %v221 = vld [vmem:[#allocation5 + $0x70] sm:$0xff]
        %v222 = vld [vmem:[#allocation5 + $0x78] sm:$0xff]
        %v223 = vld [vmem:[%s2] sm:$0x1]
        %v225 = vlaneseq
        %v226 = vshrl.u32 %v225, 7
        %v227 = vsub.s32 0, %v226
        %v228 = vrot.slane %v223, %v227
        %v246 = vunpack.c.l.b16 %v207
        %v247 = vunpack.c.h.b16 %v207
        %v248 = vunpack.c.l.b16 %v208
        %v249 = vunpack.c.h.b16 %v208
        %v250 = vunpack.c.l.b16 %v209
        %v251 = vunpack.c.h.b16 %v209
        %v252 = vunpack.c.l.b16 %v210
        %v253 = vunpack.c.h.b16 %v210
        %v254 = vunpack.c.l.b16 %v211
        %v255 = vunpack.c.h.b16 %v211
        %v256 = vunpack.c.l.b16 %v212
        %v257 = vunpack.c.h.b16 %v212
        %v258 = vunpack.c.l.b16 %v213
        %v259 = vunpack.c.h.b16 %v213
        %v260 = vunpack.c.l.b16 %v214
        %v261 = vunpack.c.h.b16 %v214
        %v262 = vunpack.c.l.b16 %v215
        %v263 = vunpack.c.h.b16 %v215
        %v264 = vunpack.c.l.b16 %v216
        %v265 = vunpack.c.h.b16 %v216
        %v266 = vunpack.c.l.b16 %v217
        %v267 = vunpack.c.h.b16 %v217
        %v268 = vunpack.c.l.b16 %v218
        %v269 = vunpack.c.h.b16 %v218
        %v270 = vunpack.c.l.b16 %v219
        %v271 = vunpack.c.h.b16 %v219
        %v272 = vunpack.c.l.b16 %v220
        %v273 = vunpack.c.h.b16 %v220
        %v274 = vunpack.c.l.b16 %v221
        %v275 = vunpack.c.h.b16 %v221
        %v276 = vunpack.c.l.b16 %v222
        %v277 = vunpack.c.h.b16 %v222
        %v278 = vpack.c.b16 %v248, %v246
        %v279 = vpack.c.b16 %v249, %v247
        %v280 = vpack.c.b16 %v252, %v250
        %v281 = vpack.c.b16 %v253, %v251
        %v282 = vpack.c.b16 %v256, %v254
        %v283 = vpack.c.b16 %v257, %v255
        %v284 = vpack.c.b16 %v260, %v258
        %v285 = vpack.c.b16 %v261, %v259
        %v286 = vpack.c.b16 %v264, %v262
        %v287 = vpack.c.b16 %v265, %v263
        %v288 = vpack.c.b16 %v268, %v266
        %v289 = vpack.c.b16 %v269, %v267
        %v290 = vpack.c.b16 %v272, %v270
        %v291 = vpack.c.b16 %v273, %v271
        %v292 = vpack.c.b16 %v276, %v274
        %v293 = vpack.c.b16 %v277, %v275
        %310 = vmatprep.subr.bf16.mxu0 %v279
        %311 = vmatpush1.bf16.xpose.msra.mxu0 %v278
        %312 = vmatprep.subr.bf16.mxu0 %v281
        %313 = vmatpush1.bf16.xpose.msra.mxu0 %v280
        %314 = vmatprep.subr.bf16.mxu0 %v283
        %315 = vmatpush1.bf16.xpose.msra.mxu0 %v282
        %316 = vmatprep.subr.bf16.mxu0 %v285
        %317 = vmatpush1.bf16.xpose.msra.mxu0 %v284
        %318 = vmatprep.subr.bf16.mxu0 %v287
        %319 = vmatpush1.bf16.xpose.msra.mxu0 %v286
        %320 = vmatprep.subr.bf16.mxu0 %v289
        %321 = vmatpush1.bf16.xpose.msra.mxu0 %v288
        %322 = vmatprep.subr.bf16.mxu0 %v291
        %323 = vmatpush1.bf16.xpose.msra.mxu0 %v290
        %324 = vmatprep.subr.bf16.mxu0 %v293
        %325 = vmatpush1.bf16.xpose.msra.mxu0 %v292
        %326 = vmatprep.subr.bf16.mxu0 0
        %327 = vmatpush1.bf16.xpose.msra.mxu0 0
        %328 = vmatprep.subr.bf16.mxu0 0
        %329 = vmatpush1.bf16.xpose.msra.mxu0 0
        %330 = vmatprep.subr.bf16.mxu0 0
        %331 = vmatpush1.bf16.xpose.msra.mxu0 0
        %332 = vmatprep.subr.bf16.mxu0 0
        %333 = vmatpush1.bf16.xpose.msra.mxu0 0
        %334 = vmatprep.subr.bf16.mxu0 0
        %335 = vmatpush1.bf16.xpose.msra.mxu0 0
        %336 = vmatprep.subr.bf16.mxu0 0
        %337 = vmatpush1.bf16.xpose.msra.mxu0 0
        %338 = vmatprep.subr.bf16.mxu0 0
        %339 = vmatpush1.bf16.xpose.msra.mxu0 0
        %340 = vmatprep.subr.bf16.mxu0 0
        %341 = vmatpush1.bf16.xpose.msra.mxu0 0
        %342 = vmatprep.mubr.bf16.mxu0 %v206
        %343 = vmatmul.mubr.bf16.gmra.mrb[0].mxu0 %v205
        %v344 = vpop.f32.mrb[0].mxu0
        %v345 = vadd.f32 %v228, %v344
        %v346 = vpop.f32.mrb[0].mxu0
        %v347 = vpop.f32.mrb[0].mxu0
        %v348 = vpop.f32.mrb[0].mxu0
        %349 = vdwg.mxu0
        %350 = vst [vmem:[%s201] sm:$0xff] %v345
        %s351 = sand.u32 %s97, 1
        %s352 = scalar_lea.sflag [#allocation4], %s351
        %s353 = sand.u32 %s97, 1
        %s354 = smul.addr %s353, 8
        %s355 = scalar_lea.vmem [#allocation7], %s354
        // Predicated region
        $region41: #{tpu_custom_call.1} parent=31 // pred_check
          %p356 = pneg %p107
        $region42: #{tpu_custom_call.1} parent=31 // pred_check_branch
          %358 = sbr.rel (%p356) target = $region44
        $region43: #{tpu_custom_call.1} parent=31 // pred_region
          %s360 = ssub.s32 128, 128
          %361 = vsyncadd %s352, %s360
          %s362 = smul.addr %s21, 128
          %s363 = scalar_lea.hbm %s3, %s362
          %s365 = sshll.u32 %s355, 4
          %s366 = int_to_ptr.vmem [resolvable:$true] %s365
          %368 = dma.vmem_to_hbm [thread:$0]  %s366, 128, %s363, %s352
        $region44: #{tpu_custom_call.1} parent=31 // pred_fallthru
          _
      $region32: #{tpu_custom_call.1} parent=5 // pred_fallthru
        _
      %p369 = scmp.le.s32.totalorder 2, %s16
      // Predicated region
      $region45: #{tpu_custom_call.1} parent=5 // pred_check
        %p370 = pneg %p369
      $region46: #{tpu_custom_call.1} parent=5 // pred_check_branch
        %372 = sbr.rel (%p370) target = $region48
      $region47: #{tpu_custom_call.1} parent=5 // pred_region
        %s373 = ssub.s32 %s16, 2
        // Predicated region
        $region49: #{tpu_custom_call.1} parent=47 // pred_check
          %p374 = pneg %p113
        $region50: #{tpu_custom_call.1} parent=47 // pred_check_branch
          %376 = sbr.rel (%p374) target = $region52
        $region51: #{tpu_custom_call.1} parent=47 // pred_region
          %s377 = sand.u32 %s98, 1
          %s378 = scalar_lea.sflag [#allocation4], %s377
          %s379 = sand.u32 %s98, 1
          %s380 = smul.addr %s379, 8
          %s381 = scalar_lea.vmem [#allocation7], %s380
          %382 = dma.done %s378, 128
        $region52: #{tpu_custom_call.1} parent=47 // pred_fallthru
          _
      $region48: #{tpu_custom_call.1} parent=5 // pred_fallthru
        _
    $region6: #{tpu_custom_call.1} parent=1 // loop_footer
      %s20 = sadd.s32 1, %s16
    $region7: #{tpu_custom_call.1} parent=1 // loop_footer_branch
      %15 = sbr.rel target = $region3
    $region8: #{tpu_custom_call.1} parent=1 // loop_exit
      _
    %383 = vsyncpa [#allocation3], 1
    %s384 = scalar_lea.sflag [#allocation3], 1
    %385 = vsyncpa %s384, 1
    %386 = vsyncpa [#allocation6], 1
    %387 = vsyncpa [#allocation4], 1
    %s388 = scalar_lea.sflag [#allocation4], 1
    %389 = vsyncpa %s388, 1

</llo_original>
